<compile_context>
chip_gen: v5e
topology: v5e:2x2
jax: 0.10.0
libtpu: 0.0.40
codegen_flags: <defaults>
</compile_context>

<pallas_src>
import numpy as np
import jax
import jax.numpy as jnp
from jax.experimental import pallas as pl
from jax.experimental.pallas import tpu as pltpu

# ----------------------------- config ("args") ------------------------------
BATCH = 2
MAX_SEQ_LEN = 8          # args.max_seq_length
HIDDEN = 32              # args.hidden_size
NUM_LAYERS = 2           # args.num_hidden_layers
EPS = 1e-12
# TODO(synk): args.hidden_dropout_prob — dropout is treated as eval-mode identity.


# ------------------------------ Pallas kernel -------------------------------
def fused_encoder_kernel(x_ref, f_ref, c_ref, g_ref, wa_ref, wb_ref, gb_ref,
                         mask_ref, o_ref):
    """Single invocation; every Encoder Layer runs in an unrolled in-kernel loop.

    x_ref    : (S, N)       packed input (N = 2*B*H; mean lanes first, cov last)
    f_ref    : (2Fp, S)     stacked ortho rfft matrix [Fr; Fi]
    c_ref    : (S, 2Fp)     stacked ortho irfft matrix [Cr | Ci]
    g_ref    : (N, N)       block-diagonal group-mean matrix (LayerNorm over H)
    wa_ref   : (L, 2Fp, N)  per-layer stacked filter weights [wr; wr]
    wb_ref   : (L, 2Fp, N)  per-layer stacked filter weights [-wi; wi]
    gb_ref   : (L, 2, N)    per-layer [gamma; beta] tiled to N lanes
    mask_ref : (1, N)       1.0 on cov lanes, 0.0 on mean lanes
    o_ref    : (L, S, N)    per-layer output slab
    """
    f_stk = f_ref[...]                        # (2Fp, S)
    c_stk = c_ref[...]                        # (S, 2Fp)
    gmat = g_ref[...]                         # (N, N)
    mask = mask_ref[...]                      # (1, N)
    fp = f_stk.shape[0] // 2
    s_len = x_ref.shape[0]
    num_layers = wa_ref.shape[0]

    x = x_ref[...]                            # (S, N), stays in vregs across layers

    for l in range(num_layers):               # static unrolled layer loop
        wa = wa_ref[l]                        # (2Fp, N)
        wb = wb_ref[l]                        # (2Fp, N)
        gb = gb_ref[l]                        # (2, N)

        # forward real DFT along seq: one stacked matmul -> z = [xr; xi]
        z = jnp.dot(f_stk, x, preferred_element_type=jnp.float32)        # (2Fp, N)

        # complex filter multiply via sublane roll (XLU slot) — no slice/concat copy
        y_stk = z * wa + pltpu.roll(z, fp, axis=0) * wb                   # (2Fp, N)

        # inverse real DFT: one stacked matmul (imag of DC/Nyquist discarded via Ci)
        filt = jnp.dot(c_stk, y_stk, preferred_element_type=jnp.float32)  # (S, N)

        # residual + LayerNorm over each H-lane group.
        # Group mean and E[x^2] fused into ONE matmul against G (16-row LHS).
        res = filt + x
        stats = jnp.dot(jnp.concatenate([res, res * res], axis=0), gmat,
                        preferred_element_type=jnp.float32)               # (2S, N)
        u = stats[:s_len]
        var = jnp.maximum(stats[s_len:] - u * u, 0.0)
        xn = (res - u) * jax.lax.rsqrt(var + EPS)
        y = gb[0:1, :] * xn + gb[1:2, :]

        # ELU(.) + 1 only on the cov half of the lanes (precomputed mask)
        elu1 = jnp.maximum(y, 0.0) + jnp.exp(jnp.minimum(y, 0.0))
        out = y + mask * (elu1 - y)

        o_ref[l] = out
        x = out


# ------------------------------ host helpers --------------------------------
def make_dft_matrices(seq_len):
    """Ortho real-DFT matrices, freq axis padded to multiple of 8, stacked."""
    F = seq_len // 2 + 1
    Fp = 8 * ((F + 7) // 8)
    s_idx = np.arange(seq_len)
    f_idx = np.arange(Fp)
    ang = 2.0 * np.pi * f_idx[:, None] * s_idx[None, :] / seq_len     # (Fp, S)
    scale = 1.0 / np.sqrt(seq_len)
    valid = (f_idx < F)[:, None]

    Fr = np.where(valid, np.cos(ang) * scale, 0.0)                    # rfft real
    Fi = np.where(valid, -np.sin(ang) * scale, 0.0)                   # rfft imag

    c = np.where((f_idx == 0) | ((seq_len % 2 == 0) & (f_idx == seq_len // 2)),
                 1.0, 2.0)
    c = np.where(f_idx < F, c, 0.0)
    Cr = (np.cos(ang) * c[:, None] * scale).T                         # (S, Fp)
    Ci = (-np.sin(ang) * c[:, None] * scale).T                        # (S, Fp)

    F_stk = np.concatenate([Fr, Fi], axis=0)                          # (2Fp, S)
    C_stk = np.concatenate([Cr, Ci], axis=1)                          # (S, 2Fp)
    return (jnp.asarray(F_stk, jnp.float32), jnp.asarray(C_stk, jnp.float32),
            F, Fp)


def make_group_mean_matrix(B, H):
    """(N, N) block-diagonal matrix: res @ G == per-H-group mean broadcast."""
    G = np.kron(np.eye(2 * B), np.ones((H, H), np.float64) / H)
    return jnp.asarray(G, jnp.float32)


def pack_layer_params(layer_params_list, F, Fp, B, H):
    """Pack per-layer filters as A=[wr;wr], B=[-wi;wi] (L,2Fp,N); gamma/beta (L,2,N)."""
    WAs, WBs, GBs = [], [], []
    for lp in layer_params_list:
        def pad_tile(w2d):                              # (F, H) -> (Fp, B*H)
            w = jnp.pad(w2d, ((0, Fp - F), (0, 0)))
            return jnp.tile(w, (1, B))
        wr = jnp.concatenate([pad_tile(lp["mwr"]), pad_tile(lp["cwr"])], axis=1)
        wi = jnp.concatenate([pad_tile(lp["mwi"]), pad_tile(lp["cwi"])], axis=1)
        WAs.append(jnp.concatenate([wr, wr], axis=0))                  # (2Fp, N)
        WBs.append(jnp.concatenate([-wi, wi], axis=0))                 # (2Fp, N)
        gamma = jnp.tile(lp["gamma"].reshape(1, H), (1, 2 * B))        # (1, N)
        beta = jnp.tile(lp["beta"].reshape(1, H), (1, 2 * B))          # (1, N)
        GBs.append(jnp.concatenate([gamma, beta], axis=0))             # (2, N)
    return (jnp.stack(WAs, axis=0), jnp.stack(WBs, axis=0),
            jnp.stack(GBs, axis=0))


# ------------------------------ fused forward --------------------------------
def encoder_forward(xm, xc, params, output_all_encoded_layers=True):
    B, S, H = xm.shape
    F_stk, C_stk = params["dft"]
    WA, WB, GB, G = params["WA"], params["WB"], params["GB"], params["G"]
    L = WA.shape[0]
    N = 2 * B * H
    Fp2 = F_stk.shape[0]

    # pack both streams + batch into one lane-dense (S, 2*B*H) slab
    x_all = jnp.concatenate([xm, xc], axis=0)               # (2B, S, H)
    x2d = jnp.transpose(x_all, (1, 0, 2)).reshape(S, N)     # (S, N)
    mask = (jnp.arange(N) >= N // 2).astype(jnp.float32).reshape(1, N)

    out = pl.pallas_call(
        fused_encoder_kernel,
        out_shape=jax.ShapeDtypeStruct((L, S, N), jnp.float32),
        grid_spec=pltpu.PrefetchScalarGridSpec(
            num_scalar_prefetch=0,
            grid=(1,),                                   # single invocation
            in_specs=[
                pl.BlockSpec((S, N), lambda i: (0, 0)),          # packed activations
                pl.BlockSpec((Fp2, S), lambda i: (0, 0)),        # [Fr; Fi]
                pl.BlockSpec((S, Fp2), lambda i: (0, 0)),        # [Cr | Ci]
                pl.BlockSpec((N, N), lambda i: (0, 0)),          # group-mean matrix
                pl.BlockSpec((L, Fp2, N), lambda i: (0, 0, 0)),  # filter A = [wr;wr]
                pl.BlockSpec((L, Fp2, N), lambda i: (0, 0, 0)),  # filter B = [-wi;wi]
                pl.BlockSpec((L, 2, N), lambda i: (0, 0, 0)),    # [gamma; beta]
                pl.BlockSpec((1, N), lambda i: (0, 0)),          # cov-lane mask
            ],
            out_specs=pl.BlockSpec((L, S, N), lambda i: (0, 0, 0)),
        ),
        compiler_params=pltpu.CompilerParams(dimension_semantics=("arbitrary",)),
    )(x2d, F_stk, C_stk, G, WA, WB, GB, mask)

    # unpack (L, S, N) -> per-layer [(B,S,H) mean, (B,S,H) cov]
    outs = out.reshape(L, S, 2 * B, H).transpose(0, 2, 1, 3)    # (L, 2B, S, H)
    all_layers = [[outs[li, :B], outs[li, B:]] for li in range(L)]
    if not output_all_encoded_layers:
        return [all_layers[-1]]
    return all_layers


# ------------------------- pure-JAX reference (check) ------------------------
def ref_layer(xm, xc, mw_c, cw_c, gamma, beta, S):
    def filt(x, w):
        X = jnp.fft.rfft(x, axis=1, norm="ortho")
        X = X * w[None]
        return jnp.fft.irfft(X, n=S, axis=1, norm="ortho")

    def ln(x):
        u = x.mean(-1, keepdims=True)
        s = ((x - u) ** 2).mean(-1, keepdims=True)
        return gamma * ((x - u) / jnp.sqrt(s + EPS)) + beta

    ym = ln(filt(xm, mw_c) + xm)
    yc = ln(filt(xc, cw_c) + xc)
    yc = jnp.where(yc > 0, yc, jnp.exp(yc) - 1.0) + 1.0
    return ym, yc


# ----------------------------------- main ------------------------------------
if __name__ == "__main__":
    key = jax.random.PRNGKey(0)
    k_xm, k_xc, k_mw, k_cw = jax.random.split(key, 4)

    xm = jax.random.normal(k_xm, (BATCH, MAX_SEQ_LEN, HIDDEN), jnp.float32)
    xc = jax.random.normal(k_xc, (BATCH, MAX_SEQ_LEN, HIDDEN), jnp.float32)

    F_stk, C_stk, F, Fp = make_dft_matrices(MAX_SEQ_LEN)

    # Parameters.  Encoder deep-copies one Layer, so every layer shares the
    # same (deterministic) initial values.  complex_weight ~ randn * 0.02.
    mean_w = jax.random.normal(k_mw, (1, F, HIDDEN, 2), jnp.float32) * 0.02
    cov_w = jax.random.normal(k_cw, (1, F, HIDDEN, 2), jnp.float32) * 0.02

    layer_params = {
        "mwr": mean_w[0, :, :, 0], "mwi": mean_w[0, :, :, 1],
        "cwr": cov_w[0, :, :, 0], "cwi": cov_w[0, :, :, 1],
        "gamma": jnp.ones((HIDDEN,), jnp.float32),
        "beta": jnp.zeros((HIDDEN,), jnp.float32),
    }
    layer_list = [layer_params for _ in range(NUM_LAYERS)]

    WA, WB, GB = pack_layer_params(layer_list, F, Fp, BATCH, HIDDEN)
    G = make_group_mean_matrix(BATCH, HIDDEN)
    params = {"dft": (F_stk, C_stk), "WA": WA, "WB": WB, "GB": GB, "G": G}

    outs = encoder_forward(xm, xc, params, output_all_encoded_layers=True)
    jax.block_until_ready(outs)

    # correctness check against pure-JAX (jnp.fft) reference
    mw_c = mean_w[0, :, :, 0] + 1j * mean_w[0, :, :, 1]
    cw_c = cov_w[0, :, :, 0] + 1j * cov_w[0, :, :, 1]
    rm, rc = xm, xc
    ok = True
    for li in range(NUM_LAYERS):
        rm, rc = ref_layer(rm, rc, mw_c, cw_c,
                           layer_params["gamma"], layer_params["beta"],
                           MAX_SEQ_LEN)
        ok &= bool(np.allclose(np.asarray(outs[li][0]), np.asarray(rm),
                               atol=1e-4, rtol=1e-4))
        ok &= bool(np.allclose(np.asarray(outs[li][1]), np.asarray(rc),
                               atol=1e-4, rtol=1e-4))
    assert ok, "Pallas output mismatch vs jnp.fft reference"

    print("KERNEL_OK")
</pallas_src>

<mosaic_0001>
module attributes {stable_mosaic.version = 11 : i64} {
  func.func @fused_encoder_kernel(%arg0: i32, %arg1: memref<8x128xf32, #tpu.memory_space<vmem>>, %arg2: memref<16x8xf32, #tpu.memory_space<vmem>>, %arg3: memref<8x16xf32, #tpu.memory_space<vmem>>, %arg4: memref<128x128xf32, #tpu.memory_space<vmem>>, %arg5: memref<2x16x128xf32, #tpu.memory_space<vmem>>, %arg6: memref<2x16x128xf32, #tpu.memory_space<vmem>>, %arg7: memref<2x2x128xf32, #tpu.memory_space<vmem>>, %arg8: memref<1x128xf32, #tpu.memory_space<vmem>>, %arg9: memref<2x8x128xf32, #tpu.memory_space<vmem>>) attributes {dimension_semantics = [#tpu.dimension_semantics<arbitrary>], iteration_bounds = array<i64: 1>, scalar_prefetch = 0 : i64, scratch_operands = 0 : i64, tpu.core_type = #tpu.core_type<tc>, window_params = [{pipeline_mode = #tpu.pipeline_mode<synchronous>, transform_indices = @transform_0, window_bounds = array<i64: 8, 128>}, {pipeline_mode = #tpu.pipeline_mode<synchronous>, transform_indices = @transform_1, window_bounds = array<i64: 16, 8>}, {pipeline_mode = #tpu.pipeline_mode<synchronous>, transform_indices = @transform_2, window_bounds = array<i64: 8, 16>}, {pipeline_mode = #tpu.pipeline_mode<synchronous>, transform_indices = @transform_3, window_bounds = array<i64: 128, 128>}, {pipeline_mode = #tpu.pipeline_mode<synchronous>, transform_indices = @transform_4, window_bounds = array<i64: 2, 16, 128>}, {pipeline_mode = #tpu.pipeline_mode<synchronous>, transform_indices = @transform_5, window_bounds = array<i64: 2, 16, 128>}, {pipeline_mode = #tpu.pipeline_mode<synchronous>, transform_indices = @transform_6, window_bounds = array<i64: 2, 2, 128>}, {pipeline_mode = #tpu.pipeline_mode<synchronous>, transform_indices = @transform_7, window_bounds = array<i64: 1, 128>}, {pipeline_mode = #tpu.pipeline_mode<synchronous>, transform_indices = @transform_8, window_bounds = array<i64: 2, 8, 128>}]} {
    %c0 = arith.constant 0 : index
    %c0_0 = arith.constant 0 : index
    %0 = vector.load %arg2[%c0, %c0_0] : memref<16x8xf32, #tpu.memory_space<vmem>>, vector<16x8xf32>
    %c0_1 = arith.constant 0 : index
    %c0_2 = arith.constant 0 : index
    %1 = vector.load %arg3[%c0_1, %c0_2] : memref<8x16xf32, #tpu.memory_space<vmem>>, vector<8x16xf32>
    %c0_3 = arith.constant 0 : index
    %c0_4 = arith.constant 0 : index
    %2 = vector.load %arg4[%c0_3, %c0_4] : memref<128x128xf32, #tpu.memory_space<vmem>>, vector<128x128xf32>
    %c0_5 = arith.constant 0 : index
    %c0_6 = arith.constant 0 : index
    %3 = vector.load %arg8[%c0_5, %c0_6] : memref<1x128xf32, #tpu.memory_space<vmem>>, vector<1x128xf32>
    %c0_7 = arith.constant 0 : index
    %c0_8 = arith.constant 0 : index
    %4 = vector.load %arg1[%c0_7, %c0_8] : memref<8x128xf32, #tpu.memory_space<vmem>>, vector<8x128xf32>
    %c0_9 = arith.constant 0 : index
    %c0_10 = arith.constant 0 : index
    %c0_11 = arith.constant 0 : index
    %5 = vector.load %arg5[%c0_9, %c0_10, %c0_11] : memref<2x16x128xf32, #tpu.memory_space<vmem>>, vector<1x16x128xf32>
    %6 = vector.shape_cast %5 : vector<1x16x128xf32> to vector<16x128xf32>
    %c0_12 = arith.constant 0 : index
    %c0_13 = arith.constant 0 : index
    %c0_14 = arith.constant 0 : index
    %7 = vector.load %arg6[%c0_12, %c0_13, %c0_14] : memref<2x16x128xf32, #tpu.memory_space<vmem>>, vector<1x16x128xf32>
    %8 = vector.shape_cast %7 : vector<1x16x128xf32> to vector<16x128xf32>
    %c0_15 = arith.constant 0 : index
    %c0_16 = arith.constant 0 : index
    %c0_17 = arith.constant 0 : index
    %9 = vector.load %arg7[%c0_15, %c0_16, %c0_17] : memref<2x2x128xf32, #tpu.memory_space<vmem>>, vector<1x2x128xf32>
    %10 = vector.shape_cast %9 : vector<1x2x128xf32> to vector<2x128xf32>
    %cst = arith.constant dense<0.000000e+00> : vector<16x128xf32>
    %11 = tpu.matmul %0, %4, %cst {dimension_numbers = #tpu.dot_dimension_numbers<[1], [0], [0], [1], [0, 0, 1, 1], [], []>} : vector<16x8xf32>, vector<8x128xf32>, vector<16x128xf32> -> vector<16x128xf32>
    %12 = arith.mulf %11, %6 : vector<16x128xf32>
    %c8_i32 = arith.constant 8 : i32
    %13 = tpu.dynamic_rotate %11 by %c8_i32 dim 0 : vector<16x128xf32>, i32 -> vector<16x128xf32>
    %14 = arith.mulf %13, %8 : vector<16x128xf32>
    %15 = arith.addf %12, %14 : vector<16x128xf32>
    %cst_18 = arith.constant dense<0.000000e+00> : vector<8x128xf32>
    %16 = tpu.matmul %1, %15, %cst_18 {dimension_numbers = #tpu.dot_dimension_numbers<[1], [0], [0], [1], [0, 0, 1, 1], [], []>} : vector<8x16xf32>, vector<16x128xf32>, vector<8x128xf32> -> vector<8x128xf32>
    %17 = arith.addf %16, %4 : vector<8x128xf32>
    %18 = arith.mulf %17, %17 : vector<8x128xf32>
    %19 = tpu.concatenate %17, %18 in 0 : vector<8x128xf32>, vector<8x128xf32> -> vector<16x128xf32>
    %cst_19 = arith.constant dense<0.000000e+00> : vector<16x128xf32>
    %20 = tpu.matmul %19, %2, %cst_19 {dimension_numbers = #tpu.dot_dimension_numbers<[1], [0], [0], [1], [0, 0, 1, 1], [], []>} : vector<16x128xf32>, vector<128x128xf32>, vector<16x128xf32> -> vector<16x128xf32>
    %21 = vector.extract_strided_slice %20 {offsets = [0, 0], sizes = [8, 128], strides = [1, 1]} : vector<16x128xf32> to vector<8x128xf32>
    %22 = vector.extract_strided_slice %20 {offsets = [8, 0], sizes = [8, 128], strides = [1, 1]} : vector<16x128xf32> to vector<8x128xf32>
    %23 = arith.mulf %21, %21 : vector<8x128xf32>
    %24 = arith.subf %22, %23 : vector<8x128xf32>
    %cst_20 = arith.constant 0.000000e+00 : f32
    %25 = vector.broadcast %cst_20 : f32 to vector<8x128xf32>
    %26 = arith.maximumf %24, %25 : vector<8x128xf32>
    %27 = arith.subf %17, %21 : vector<8x128xf32>
    %cst_21 = arith.constant 9.99999996E-13 : f32
    %28 = vector.broadcast %cst_21 : f32 to vector<8x128xf32>
    %29 = arith.addf %26, %28 : vector<8x128xf32>
    %30 = math.rsqrt %29 : vector<8x128xf32>
    %31 = arith.mulf %27, %30 : vector<8x128xf32>
    %32 = vector.extract_strided_slice %10 {offsets = [0, 0], sizes = [1, 128], strides = [1, 1]} : vector<2x128xf32> to vector<1x128xf32>
    %33 = vector.broadcast %32 : vector<1x128xf32> to vector<8x128xf32>
    %34 = arith.mulf %33, %31 : vector<8x128xf32>
    %35 = vector.extract_strided_slice %10 {offsets = [1, 0], sizes = [1, 128], strides = [1, 1]} : vector<2x128xf32> to vector<1x128xf32>
    %36 = vector.broadcast %35 : vector<1x128xf32> to vector<8x128xf32>
    %37 = arith.addf %34, %36 : vector<8x128xf32>
    %cst_22 = arith.constant 0.000000e+00 : f32
    %38 = vector.broadcast %cst_22 : f32 to vector<8x128xf32>
    %39 = arith.maximumf %37, %38 : vector<8x128xf32>
    %cst_23 = arith.constant 0.000000e+00 : f32
    %40 = vector.broadcast %cst_23 : f32 to vector<8x128xf32>
    %41 = arith.minimumf %37, %40 : vector<8x128xf32>
    %42 = math.exp %41 : vector<8x128xf32>
    %43 = arith.addf %39, %42 : vector<8x128xf32>
    %44 = arith.subf %43, %37 : vector<8x128xf32>
    %45 = vector.broadcast %3 : vector<1x128xf32> to vector<8x128xf32>
    %46 = arith.mulf %45, %44 : vector<8x128xf32>
    %47 = arith.addf %37, %46 : vector<8x128xf32>
    %c0_24 = arith.constant 0 : index
    %c0_25 = arith.constant 0 : index
    %c0_26 = arith.constant 0 : index
    %48 = vector.load %arg9[%c0_24, %c0_25, %c0_26] : memref<2x8x128xf32, #tpu.memory_space<vmem>>, vector<1x8x128xf32>
    %49 = vector.shape_cast %48 : vector<1x8x128xf32> to vector<8x128xf32>
    %50 = vector.shape_cast %47 : vector<8x128xf32> to vector<1x8x128xf32>
    tpu.vector_store %arg9[%c0_24, %c0_25, %c0_26], %50 {strides = array<i32>} : memref<2x8x128xf32, #tpu.memory_space<vmem>>, vector<1x8x128xf32>,
    %c1 = arith.constant 1 : index
    %c0_27 = arith.constant 0 : index
    %c0_28 = arith.constant 0 : index
    %51 = vector.load %arg5[%c1, %c0_27, %c0_28] : memref<2x16x128xf32, #tpu.memory_space<vmem>>, vector<1x16x128xf32>
    %52 = vector.shape_cast %51 : vector<1x16x128xf32> to vector<16x128xf32>
    %c1_29 = arith.constant 1 : index
    %c0_30 = arith.constant 0 : index
    %c0_31 = arith.constant 0 : index
    %53 = vector.load %arg6[%c1_29, %c0_30, %c0_31] : memref<2x16x128xf32, #tpu.memory_space<vmem>>, vector<1x16x128xf32>
    %54 = vector.shape_cast %53 : vector<1x16x128xf32> to vector<16x128xf32>
    %c1_32 = arith.constant 1 : index
    %c0_33 = arith.constant 0 : index
    %c0_34 = arith.constant 0 : index
    %55 = vector.load %arg7[%c1_32, %c0_33, %c0_34] : memref<2x2x128xf32, #tpu.memory_space<vmem>>, vector<1x2x128xf32>
    %56 = vector.shape_cast %55 : vector<1x2x128xf32> to vector<2x128xf32>
    %cst_35 = arith.constant dense<0.000000e+00> : vector<16x128xf32>
    %57 = tpu.matmul %0, %47, %cst_35 {dimension_numbers = #tpu.dot_dimension_numbers<[1], [0], [0], [1], [0, 0, 1, 1], [], []>} : vector<16x8xf32>, vector<8x128xf32>, vector<16x128xf32> -> vector<16x128xf32>
    %58 = arith.mulf %57, %52 : vector<16x128xf32>
    %c8_i32_36 = arith.constant 8 : i32
    %59 = tpu.dynamic_rotate %57 by %c8_i32_36 dim 0 : vector<16x128xf32>, i32 -> vector<16x128xf32>
    %60 = arith.mulf %59, %54 : vector<16x128xf32>
    %61 = arith.addf %58, %60 : vector<16x128xf32>
    %cst_37 = arith.constant dense<0.000000e+00> : vector<8x128xf32>
    %62 = tpu.matmul %1, %61, %cst_37 {dimension_numbers = #tpu.dot_dimension_numbers<[1], [0], [0], [1], [0, 0, 1, 1], [], []>} : vector<8x16xf32>, vector<16x128xf32>, vector<8x128xf32> -> vector<8x128xf32>
    %63 = arith.addf %62, %47 : vector<8x128xf32>
    %64 = arith.mulf %63, %63 : vector<8x128xf32>
    %65 = tpu.concatenate %63, %64 in 0 : vector<8x128xf32>, vector<8x128xf32> -> vector<16x128xf32>
    %cst_38 = arith.constant dense<0.000000e+00> : vector<16x128xf32>
    %66 = tpu.matmul %65, %2, %cst_38 {dimension_numbers = #tpu.dot_dimension_numbers<[1], [0], [0], [1], [0, 0, 1, 1], [], []>} : vector<16x128xf32>, vector<128x128xf32>, vector<16x128xf32> -> vector<16x128xf32>
    %67 = vector.extract_strided_slice %66 {offsets = [0, 0], sizes = [8, 128], strides = [1, 1]} : vector<16x128xf32> to vector<8x128xf32>
    %68 = vector.extract_strided_slice %66 {offsets = [8, 0], sizes = [8, 128], strides = [1, 1]} : vector<16x128xf32> to vector<8x128xf32>
    %69 = arith.mulf %67, %67 : vector<8x128xf32>
    %70 = arith.subf %68, %69 : vector<8x128xf32>
    %cst_39 = arith.constant 0.000000e+00 : f32
    %71 = vector.broadcast %cst_39 : f32 to vector<8x128xf32>
    %72 = arith.maximumf %70, %71 : vector<8x128xf32>
    %73 = arith.subf %63, %67 : vector<8x128xf32>
    %cst_40 = arith.constant 9.99999996E-13 : f32
    %74 = vector.broadcast %cst_40 : f32 to vector<8x128xf32>
    %75 = arith.addf %72, %74 : vector<8x128xf32>
    %76 = math.rsqrt %75 : vector<8x128xf32>
    %77 = arith.mulf %73, %76 : vector<8x128xf32>
    %78 = vector.extract_strided_slice %56 {offsets = [0, 0], sizes = [1, 128], strides = [1, 1]} : vector<2x128xf32> to vector<1x128xf32>
    %79 = vector.broadcast %78 : vector<1x128xf32> to vector<8x128xf32>
    %80 = arith.mulf %79, %77 : vector<8x128xf32>
    %81 = vector.extract_strided_slice %56 {offsets = [1, 0], sizes = [1, 128], strides = [1, 1]} : vector<2x128xf32> to vector<1x128xf32>
    %82 = vector.broadcast %81 : vector<1x128xf32> to vector<8x128xf32>
    %83 = arith.addf %80, %82 : vector<8x128xf32>
    %cst_41 = arith.constant 0.000000e+00 : f32
    %84 = vector.broadcast %cst_41 : f32 to vector<8x128xf32>
    %85 = arith.maximumf %83, %84 : vector<8x128xf32>
    %cst_42 = arith.constant 0.000000e+00 : f32
    %86 = vector.broadcast %cst_42 : f32 to vector<8x128xf32>
    %87 = arith.minimumf %83, %86 : vector<8x128xf32>
    %88 = math.exp %87 : vector<8x128xf32>
    %89 = arith.addf %85, %88 : vector<8x128xf32>
    %90 = arith.subf %89, %83 : vector<8x128xf32>
    %91 = vector.broadcast %3 : vector<1x128xf32> to vector<8x128xf32>
    %92 = arith.mulf %91, %90 : vector<8x128xf32>
    %93 = arith.addf %83, %92 : vector<8x128xf32>
    %c1_43 = arith.constant 1 : index
    %c0_44 = arith.constant 0 : index
    %c0_45 = arith.constant 0 : index
    %94 = vector.load %arg9[%c1_43, %c0_44, %c0_45] : memref<2x8x128xf32, #tpu.memory_space<vmem>>, vector<1x8x128xf32>
    %95 = vector.shape_cast %94 : vector<1x8x128xf32> to vector<8x128xf32>
    %96 = vector.shape_cast %93 : vector<8x128xf32> to vector<1x8x128xf32>
    tpu.vector_store %arg9[%c1_43, %c0_44, %c0_45], %96 {strides = array<i32>} : memref<2x8x128xf32, #tpu.memory_space<vmem>>, vector<1x8x128xf32>,
    return
  }
  func.func @transform_0(%arg0: i32) -> (i32, i32) {
    %c0_i32 = arith.constant 0 : i32
    %c0_i32_0 = arith.constant 0 : i32
    %c0_i32_1 = arith.constant 0 : i32
    return %c0_i32, %c0_i32_0 : i32, i32
  }
  func.func @transform_1(%arg0: i32) -> (i32, i32) {
    %c0_i32 = arith.constant 0 : i32
    %c0_i32_0 = arith.constant 0 : i32
    %c0_i32_1 = arith.constant 0 : i32
    return %c0_i32, %c0_i32_0 : i32, i32
  }
  func.func @transform_2(%arg0: i32) -> (i32, i32) {
    %c0_i32 = arith.constant 0 : i32
    %c0_i32_0 = arith.constant 0 : i32
    %c0_i32_1 = arith.constant 0 : i32
    return %c0_i32, %c0_i32_0 : i32, i32
  }
  func.func @transform_3(%arg0: i32) -> (i32, i32) {
    %c0_i32 = arith.constant 0 : i32
    %c0_i32_0 = arith.constant 0 : i32
    %c0_i32_1 = arith.constant 0 : i32
    return %c0_i32, %c0_i32_0 : i32, i32
  }
  func.func @transform_4(%arg0: i32) -> (i32, i32, i32) {
    %c0_i32 = arith.constant 0 : i32
    %c0_i32_0 = arith.constant 0 : i32
    %c0_i32_1 = arith.constant 0 : i32
    %c0_i32_2 = arith.constant 0 : i32
    return %c0_i32, %c0_i32_0, %c0_i32_1 : i32, i32, i32
  }
  func.func @transform_5(%arg0: i32) -> (i32, i32, i32) {
    %c0_i32 = arith.constant 0 : i32
    %c0_i32_0 = arith.constant 0 : i32
    %c0_i32_1 = arith.constant 0 : i32
    %c0_i32_2 = arith.constant 0 : i32
    return %c0_i32, %c0_i32_0, %c0_i32_1 : i32, i32, i32
  }
  func.func @transform_6(%arg0: i32) -> (i32, i32, i32) {
    %c0_i32 = arith.constant 0 : i32
    %c0_i32_0 = arith.constant 0 : i32
    %c0_i32_1 = arith.constant 0 : i32
    %c0_i32_2 = arith.constant 0 : i32
    return %c0_i32, %c0_i32_0, %c0_i32_1 : i32, i32, i32
  }
  func.func @transform_7(%arg0: i32) -> (i32, i32) {
    %c0_i32 = arith.constant 0 : i32
    %c0_i32_0 = arith.constant 0 : i32
    %c0_i32_1 = arith.constant 0 : i32
    return %c0_i32, %c0_i32_0 : i32, i32
  }
  func.func @transform_8(%arg0: i32) -> (i32, i32, i32) {
    %c0_i32 = arith.constant 0 : i32
    %c0_i32_0 = arith.constant 0 : i32
    %c0_i32_1 = arith.constant 0 : i32
    %c0_i32_2 = arith.constant 0 : i32
    return %c0_i32, %c0_i32_0, %c0_i32_1 : i32, i32, i32
  }
}

</mosaic_0001>

<llo_original>
// kernel: tpu_custom_call.1
$region0: #{tpu_custom_call.1}
  #allocation0 [shape = 'u32[]', space=smem, size = 0x4, offset = 0x4, fixed_abs, tag = 'smem constant byte address 0x4 - core index']
  #allocation1 [shape = 'u32[72,128]{1,0:T(1,128)}', space=vmem, size = 0x9000, scoped, tag = 'internal scratch']
  %s0 = inlined_call_operand.vmem [shape: f32[8,128], index: 0, kind: input, shape index: {}]
  %s1 = inlined_call_operand.vmem [shape: f32[16,8], index: 1, kind: input, shape index: {}]
  %s2 = inlined_call_operand.vmem [shape: f32[8,16], index: 2, kind: input, shape index: {}]
  %s3 = inlined_call_operand.hbm [shape: f32[128,128], index: 3, kind: input, shape index: {}]
  %s4 = inlined_call_operand.hbm [shape: f32[2,16,128], index: 4, kind: input, shape index: {}]
  %s5 = inlined_call_operand.hbm [shape: f32[2,16,128], index: 5, kind: input, shape index: {}]
  %s6 = inlined_call_operand.vmem [shape: f32[2,2,128], index: 6, kind: input, shape index: {}]
  %s7 = inlined_call_operand.vmem [shape: f32[1,128], index: 7, kind: input, shape index: {}]
  %s8 = inlined_call_operand.hbm [shape: f32[2,8,128], index: 8, kind: output, shape index: {}]
  %s9 = sld [smem:[#allocation0]]
  $region54: #{tpu_custom_call.1} parent=0
    _
  %s11 = ssub.s32 1, %s9
  %s12 = scalar_select 0, %s11, %s9
  $region1: #{tpu_custom_call.1} parent=0
    #allocation2 [shape = 'u8[65536]{0}', space=vmem, size = 0x10000, scoped, tag = 'input window, operand 3, single buffered']
    #allocation3 [shape = 's32[1]{0}', space=sflag, size = 0x4, scoped, tag = 'scoped memory for tpu_custom_call.1']
    #allocation4 [shape = 's32[1]{0}', space=sflag, size = 0x4, scoped, tag = 'scoped memory for tpu_custom_call.1']
    #allocation5 [shape = 'u8[16384]{0}', space=vmem, size = 0x4000, scoped, tag = 'input window, operand 4, single buffered']
    #allocation6 [shape = 's32[1]{0}', space=sflag, size = 0x4, scoped, tag = 'scoped memory for tpu_custom_call.1']
    #allocation7 [shape = 'u8[16384]{0}', space=vmem, size = 0x4000, scoped, tag = 'input window, operand 5, single buffered']
    #allocation8 [shape = 'u8[8192]{0}', space=vmem, size = 0x2000, scoped, tag = 'output window, operand 0, single buffered']
    %13 = vsyncpa [#allocation3], 0
    %14 = vsyncpa [#allocation6], 0
    %15 = vsyncpa [#allocation4], 0
    // Predicated region
    $region2: #{tpu_custom_call.1} parent=1 // pred_check
      _
    $region3: #{tpu_custom_call.1} parent=1 // pred_check_branch
      %17 = sbr.rel (0) target = $region5
    $region4: #{tpu_custom_call.1} parent=1 // pred_region
      _
    $region5: #{tpu_custom_call.1} parent=1 // pred_fallthru
      _
    // Predicated region
    $region6: #{tpu_custom_call.1} parent=1 // pred_check
      _
    $region7: #{tpu_custom_call.1} parent=1 // pred_check_branch
      %19 = sbr.rel (0) target = $region9
    $region8: #{tpu_custom_call.1} parent=1 // pred_region
      _
    $region9: #{tpu_custom_call.1} parent=1 // pred_fallthru
      _
    // Predicated region
    $region10: #{tpu_custom_call.1} parent=1 // pred_check
      _
    $region11: #{tpu_custom_call.1} parent=1 // pred_check_branch
      %21 = sbr.rel (0) target = $region13
    $region12: #{tpu_custom_call.1} parent=1 // pred_region
      _
    $region13: #{tpu_custom_call.1} parent=1 // pred_fallthru
      _
    // Predicated region
    $region14: #{tpu_custom_call.1} parent=1 // pred_check
      _
    $region15: #{tpu_custom_call.1} parent=1 // pred_check_branch
      %23 = sbr.rel (0) target = $region17
    $region16: #{tpu_custom_call.1} parent=1 // pred_region
      %25 = vsyncadd [#allocation3], 0
      %s26 = sshll.u32 %s3, 4
      %s27 = int_to_ptr.hbm [resolvable:$true] %s26
      %s28 = sshll.u32 [#allocation2], 4
      %s29 = int_to_ptr.vmem [resolvable:$true] %s28
      %34 = dma.hbm_to_vmem [thread:$0]  %s27, 2048, %s29, [#allocation3], 128, 128, 8
    $region17: #{tpu_custom_call.1} parent=1 // pred_fallthru
      _
    // Predicated region
    $region18: #{tpu_custom_call.1} parent=1 // pred_check
      _
    $region19: #{tpu_custom_call.1} parent=1 // pred_check_branch
      %36 = sbr.rel (0) target = $region21
    $region20: #{tpu_custom_call.1} parent=1 // pred_region
      %38 = vsyncadd [#allocation6], 0
      %s39 = sshll.u32 %s4, 4
      %s40 = int_to_ptr.hbm [resolvable:$true] %s39
      %s41 = sshll.u32 [#allocation5], 4
      %s42 = int_to_ptr.vmem [resolvable:$true] %s41
      %47 = dma.hbm_to_vmem [thread:$0]  %s40, 512, %s42, [#allocation6], 128, 128, 8
    $region21: #{tpu_custom_call.1} parent=1 // pred_fallthru
      _
    // Predicated region
    $region22: #{tpu_custom_call.1} parent=1 // pred_check
      _
    $region23: #{tpu_custom_call.1} parent=1 // pred_check_branch
      %49 = sbr.rel (0) target = $region25
    $region24: #{tpu_custom_call.1} parent=1 // pred_region
      %51 = vsyncadd [#allocation6], 0
      %s52 = sshll.u32 %s5, 4
      %s53 = int_to_ptr.hbm [resolvable:$true] %s52
      %s54 = sshll.u32 [#allocation7], 4
      %s55 = int_to_ptr.vmem [resolvable:$true] %s54
      %60 = dma.hbm_to_vmem [thread:$0]  %s53, 512, %s55, [#allocation6], 128, 128, 8
    $region25: #{tpu_custom_call.1} parent=1 // pred_fallthru
      _
    // Predicated region
    $region26: #{tpu_custom_call.1} parent=1 // pred_check
      _
    $region27: #{tpu_custom_call.1} parent=1 // pred_check_branch
      %62 = sbr.rel (0) target = $region29
    $region28: #{tpu_custom_call.1} parent=1 // pred_region
      _
    $region29: #{tpu_custom_call.1} parent=1 // pred_fallthru
      _
    // Predicated region
    $region30: #{tpu_custom_call.1} parent=1 // pred_check
      _
    $region31: #{tpu_custom_call.1} parent=1 // pred_check_branch
      %64 = sbr.rel (0) target = $region33
    $region32: #{tpu_custom_call.1} parent=1 // pred_region
      _
    $region33: #{tpu_custom_call.1} parent=1 // pred_fallthru
      _
    // Predicated region
    $region34: #{tpu_custom_call.1} parent=1 // pred_check
      _
    $region35: #{tpu_custom_call.1} parent=1 // pred_check_branch
      %66 = sbr.rel (0) target = $region37
    $region36: #{tpu_custom_call.1} parent=1 // pred_region
      %68 = dma.done [#allocation3], 2048
    $region37: #{tpu_custom_call.1} parent=1 // pred_fallthru
      _
    // Predicated region
    $region38: #{tpu_custom_call.1} parent=1 // pred_check
      _
    $region39: #{tpu_custom_call.1} parent=1 // pred_check_branch
      %70 = sbr.rel (0) target = $region41
    $region40: #{tpu_custom_call.1} parent=1 // pred_region
      %72 = dma.done [#allocation6], 512
    $region41: #{tpu_custom_call.1} parent=1 // pred_fallthru
      _
    // Predicated region
    $region42: #{tpu_custom_call.1} parent=1 // pred_check
      _
    $region43: #{tpu_custom_call.1} parent=1 // pred_check_branch
      %74 = sbr.rel (0) target = $region45
    $region44: #{tpu_custom_call.1} parent=1 // pred_region
      %76 = dma.done [#allocation6], 512
    $region45: #{tpu_custom_call.1} parent=1 // pred_fallthru
      _
    %v77 = vld [vmem:[%s1] sm:$0xff]
    %v78 = vld [vmem:[%s1 + $0x8] sm:$0xff]
    %v79 = vld [vmem:[%s2] sm:$0xff]
    %v80 = vld [vmem:[#allocation2] sm:$0xff]
    %v81 = vld [vmem:[#allocation2 + $0x8] sm:$0xff]
    %v82 = vld [vmem:[#allocation2 + $0x10] sm:$0xff]
    %v83 = vld [vmem:[#allocation2 + $0x18] sm:$0xff]
    %v84 = vld [vmem:[#allocation2 + $0x20] sm:$0xff]
    %v85 = vld [vmem:[#allocation2 + $0x28] sm:$0xff]
    %v86 = vld [vmem:[#allocation2 + $0x30] sm:$0xff]
    %v87 = vld [vmem:[#allocation2 + $0x38] sm:$0xff]
    %v88 = vld [vmem:[#allocation2 + $0x40] sm:$0xff]
    %v89 = vld [vmem:[#allocation2 + $0x48] sm:$0xff]
    %v90 = vld [vmem:[#allocation2 + $0x50] sm:$0xff]
    %v91 = vld [vmem:[#allocation2 + $0x58] sm:$0xff]
    %v92 = vld [vmem:[#allocation2 + $0x60] sm:$0xff]
    %v93 = vld [vmem:[#allocation2 + $0x68] sm:$0xff]
    %v94 = vld [vmem:[#allocation2 + $0x70] sm:$0xff]
    %v95 = vld [vmem:[#allocation2 + $0x78] sm:$0xff]
    %v96 = vld [vmem:[%s7] sm:$0x1]
    %v97 = vld [vmem:[%s0] sm:$0xff]
    %v98 = vld [vmem:[#allocation5] sm:$0xff]
    %v99 = vld [vmem:[#allocation5 + $0x8] sm:$0xff]
    %v100 = vld [vmem:[#allocation7] sm:$0xff]
    %v101 = vld [vmem:[#allocation7 + $0x8] sm:$0xff]
    %v102 = vld [vmem:[%s6] sm:$0x3]
    %vm103 = vcmask 64512
    %v105 = vsel %vm103, %v77, 0
    %v108 = vsel %vm103, %v78, 0
    %110 = vmatpush.msra.mxu0 0.0
    %111 = vmatpush.msra.mxu0 0.0
    %112 = vmatpush.msra.mxu0 0.0
    %113 = vmatpush.msra.mxu0 0.0
    %114 = vmatpush.msra.mxu0 0.0
    %115 = vmatpush.msra.mxu0 0.0
    %116 = vmatpush.msra.mxu0 0.0
    %117 = vmatpush.msra.mxu0 0.0
    %118 = vmatpush.msra.mxu0 0.0
    %119 = vmatpush.msra.mxu0 0.0
    %120 = vmatpush.msra.mxu0 0.0
    %121 = vmatpush.msra.mxu0 0.0
    %122 = vmatpush.msra.mxu0 0.0
    %123 = vmatpush.msra.mxu0 0.0
    %124 = vmatpush.msra.mxu0 0.0
    %125 = vmatpush.msra.mxu0 %v97
    %126 = vmatmul.f32.gmra.mxu0 %v105
    %v127 = vpop.f32.mrf.mxu0
    %v128 = vadd.f32 0.0, %v127
    %129 = vmatmul.f32.gmra.mxu0 %v108
    %v130 = vpop.f32.mrf.mxu0
    %v131 = vadd.f32 0.0, %v130
    %132 = vdwg.mxu0
    %v133 = vmul.f32 %v128, %v98
    %v134 = vmul.f32 %v131, %v99
    %v135 = vmul.f32 %v131, %v100
    %v136 = vmul.f32 %v128, %v101
    %v137 = vadd.f32 %v133, %v135
    %v138 = vadd.f32 %v134, %v136
    %vm139 = vcmask 130048
    %v141 = vsel %vm139, %v79, 0
    %143 = vmatpush.msra.mxu0 0.0
    %144 = vmatpush.msra.mxu0 0.0
    %145 = vmatpush.msra.mxu0 0.0
    %146 = vmatpush.msra.mxu0 0.0
    %147 = vmatpush.msra.mxu0 0.0
    %148 = vmatpush.msra.mxu0 0.0
    %149 = vmatpush.msra.mxu0 0.0
    %150 = vmatpush.msra.mxu0 0.0
    %151 = vmatpush.msra.mxu0 0.0
    %152 = vmatpush.msra.mxu0 0.0
    %153 = vmatpush.msra.mxu0 0.0
    %154 = vmatpush.msra.mxu0 0.0
    %155 = vmatpush.msra.mxu0 0.0
    %156 = vmatpush.msra.mxu0 0.0
    %157 = vmatpush.msra.mxu0 %v138
    %158 = vmatpush.msra.mxu0 %v137
    %159 = vmatmul.f32.gmra.mxu0 %v141
    %v160 = vpop.f32.mrf.mxu0
    %v161 = vadd.f32 %v97, %v160
    %162 = vdwg.mxu0
    %v163 = vmul.f32 %v161, %v161
    %164 = vmatpush.msra.mxu0 %v95
    %165 = vmatpush.msra.mxu0 %v94
    %166 = vmatpush.msra.mxu0 %v93
    %167 = vmatpush.msra.mxu0 %v92
    %168 = vmatpush.msra.mxu0 %v91
    %169 = vmatpush.msra.mxu0 %v90
    %170 = vmatpush.msra.mxu0 %v89
    %171 = vmatpush.msra.mxu0 %v88
    %172 = vmatpush.msra.mxu0 %v87
    %173 = vmatpush.msra.mxu0 %v86
    %174 = vmatpush.msra.mxu0 %v85
    %175 = vmatpush.msra.mxu0 %v84
    %176 = vmatpush.msra.mxu0 %v83
    %177 = vmatpush.msra.mxu0 %v82
    %178 = vmatpush.msra.mxu0 %v81
    %179 = vmatpush.msra.mxu0 %v80
    %180 = vmatmul.f32.gmra.mxu0 %v161
    %v181 = vpop.f32.mrf.mxu0
    %v182 = vadd.f32 0.0, %v181
    %183 = vmatmul.f32.gmra.mxu0 %v163
    %v184 = vpop.f32.mrf.mxu0
    %v185 = vadd.f32 0.0, %v184
    %186 = vdwg.mxu0
    %v187 = vmul.f32 %v182, %v182
    %v188 = vsub.f32 %v185, %v187
    %v189 = vmax.f32 %v188, 0.0
    %v190 = vsub.f32 %v161, %v182
    %v191 = vadd.f32 %v189, 1e-12
    %v192 = vrsqrt.pop %v191
    %v193 = vmul.f32 %v192, %v191
    %v194 = vmul.f32 %v193, %v192
    %v195 = vmul.f32 0.5, %v194
    %v196 = vsub.f32 1.5, %v195
    %v197 = vmul.f32 %v192, %v196
    %vm198 = vweird.f32 %v191
    %vm199 = vweird.f32 %v192
    %vm200 = vmor %vm198, %vm199
    %v201 = vsel %vm200, %v192, %v197
    %v202 = vmul.f32 %v190, %v201
    %v203 = vperm.slane %v102, 0
    %v204 = vmul.f32 %v203, %v202
    %v205 = vperm.slane %v102, 1
    %v206 = vadd.f32 %v204, %v205
    %v207 = vmax.f32 %v206, 0.0
    %v208 = vmin.f32 %v206, 0.0
    %v209 = vmul.f32 %v208, 1.442695
    %v210 = vpow.pop %v209
    %v211 = vadd.f32 %v207, %v210
    %v212 = vsub.f32 %v211, %v206
    %v214 = vperm.slane %v96, 0
    %v216 = vmul.f32 %v214, %v212
    %v217 = vadd.f32 %v206, %v216
    %218 = vst [vmem:[#allocation8] sm:$0xff] %v217
    %s219 = scalar_lea.vmem [#allocation5], 16
    %v220 = vld [vmem:[%s219] sm:$0xff]
    %v221 = vld [vmem:[%s219 + $0x8] sm:$0xff]
    %s222 = scalar_lea.vmem [#allocation7], 16
    %v223 = vld [vmem:[%s222] sm:$0xff]
    %v224 = vld [vmem:[%s222 + $0x8] sm:$0xff]
    %s225 = scalar_lea.vmem %s6, 2
    %v226 = vld [vmem:[%s225] sm:$0x3]
    %227 = vmatpush.msra.mxu0 0.0
    %228 = vmatpush.msra.mxu0 0.0
    %229 = vmatpush.msra.mxu0 0.0
    %230 = vmatpush.msra.mxu0 0.0
    %231 = vmatpush.msra.mxu0 0.0
    %232 = vmatpush.msra.mxu0 0.0
    %233 = vmatpush.msra.mxu0 0.0
    %234 = vmatpush.msra.mxu0 0.0
    %235 = vmatpush.msra.mxu0 0.0
    %236 = vmatpush.msra.mxu0 0.0
    %237 = vmatpush.msra.mxu0 0.0
    %238 = vmatpush.msra.mxu0 0.0
    %239 = vmatpush.msra.mxu0 0.0
    %240 = vmatpush.msra.mxu0 0.0
    %241 = vmatpush.msra.mxu0 0.0
    %242 = vmatpush.msra.mxu0 %v217
    %243 = vmatmul.f32.gmra.mxu0 %v105
    %v244 = vpop.f32.mrf.mxu0
    %v245 = vadd.f32 0.0, %v244
    %246 = vmatmul.f32.gmra.mxu0 %v108
    %v247 = vpop.f32.mrf.mxu0
    %v248 = vadd.f32 0.0, %v247
    %249 = vdwg.mxu0
    %v250 = vmul.f32 %v245, %v220
    %v251 = vmul.f32 %v248, %v221
    %v252 = vmul.f32 %v248, %v223
    %v253 = vmul.f32 %v245, %v224
    %v254 = vadd.f32 %v250, %v252
    %v255 = vadd.f32 %v251, %v253
    %256 = vmatpush.msra.mxu0 0.0
    %257 = vmatpush.msra.mxu0 0.0
    %258 = vmatpush.msra.mxu0 0.0
    %259 = vmatpush.msra.mxu0 0.0
    %260 = vmatpush.msra.mxu0 0.0
    %261 = vmatpush.msra.mxu0 0.0
    %262 = vmatpush.msra.mxu0 0.0
    %263 = vmatpush.msra.mxu0 0.0
    %264 = vmatpush.msra.mxu0 0.0
    %265 = vmatpush.msra.mxu0 0.0
    %266 = vmatpush.msra.mxu0 0.0
    %267 = vmatpush.msra.mxu0 0.0
    %268 = vmatpush.msra.mxu0 0.0
    %269 = vmatpush.msra.mxu0 0.0
    %270 = vmatpush.msra.mxu0 %v255
    %271 = vmatpush.msra.mxu0 %v254
    %272 = vmatmul.f32.gmra.mxu0 %v141
    %v273 = vpop.f32.mrf.mxu0
    %v274 = vadd.f32 %v217, %v273
    %275 = vdwg.mxu0
    %v276 = vmul.f32 %v274, %v274
    %277 = vmatpush.msra.mxu0 %v95
    %278 = vmatpush.msra.mxu0 %v94
    %279 = vmatpush.msra.mxu0 %v93
    %280 = vmatpush.msra.mxu0 %v92
    %281 = vmatpush.msra.mxu0 %v91
    %282 = vmatpush.msra.mxu0 %v90
    %283 = vmatpush.msra.mxu0 %v89
    %284 = vmatpush.msra.mxu0 %v88
    %285 = vmatpush.msra.mxu0 %v87
    %286 = vmatpush.msra.mxu0 %v86
    %287 = vmatpush.msra.mxu0 %v85
    %288 = vmatpush.msra.mxu0 %v84
    %289 = vmatpush.msra.mxu0 %v83
    %290 = vmatpush.msra.mxu0 %v82
    %291 = vmatpush.msra.mxu0 %v81
    %292 = vmatpush.msra.mxu0 %v80
    %293 = vmatmul.f32.gmra.mxu0 %v274
    %v294 = vpop.f32.mrf.mxu0
    %v295 = vadd.f32 0.0, %v294
    %296 = vmatmul.f32.gmra.mxu0 %v276
    %v297 = vpop.f32.mrf.mxu0
    %v298 = vadd.f32 0.0, %v297
    %299 = vdwg.mxu0
    %v300 = vmul.f32 %v295, %v295
    %v301 = vsub.f32 %v298, %v300
    %v302 = vmax.f32 %v301, 0.0
    %v303 = vsub.f32 %v274, %v295
    %v304 = vadd.f32 %v302, 1e-12
    %v305 = vrsqrt.pop %v304
    %v306 = vmul.f32 %v305, %v304
    %v307 = vmul.f32 %v306, %v305
    %v308 = vmul.f32 0.5, %v307
    %v309 = vsub.f32 1.5, %v308
    %v310 = vmul.f32 %v305, %v309
    %vm311 = vweird.f32 %v304
    %vm312 = vweird.f32 %v305
    %vm313 = vmor %vm311, %vm312
    %v314 = vsel %vm313, %v305, %v310
    %v315 = vmul.f32 %v303, %v314
    %v316 = vperm.slane %v226, 0
    %v317 = vmul.f32 %v316, %v315
    %v318 = vperm.slane %v226, 1
    %v319 = vadd.f32 %v317, %v318
    %v320 = vmax.f32 %v319, 0.0
    %v321 = vmin.f32 %v319, 0.0
    %v322 = vmul.f32 %v321, 1.442695
    %v323 = vpow.pop %v322
    %v324 = vadd.f32 %v320, %v323
    %v325 = vsub.f32 %v324, %v319
    %v326 = vmul.f32 %v214, %v325
    %v327 = vadd.f32 %v319, %v326
    %s328 = scalar_lea.vmem [#allocation8], 8
    %329 = vst [vmem:[%s328] sm:$0xff] %v327
    // Predicated region
    $region46: #{tpu_custom_call.1} parent=1 // pred_check
      _
    $region47: #{tpu_custom_call.1} parent=1 // pred_check_branch
      %331 = sbr.rel (0) target = $region49
    $region48: #{tpu_custom_call.1} parent=1 // pred_region
      %333 = vsyncadd [#allocation4], 0
      %s334 = sshll.u32 [#allocation8], 4
      %s335 = int_to_ptr.vmem [resolvable:$true] %s334
      %s336 = sshll.u32 %s8, 4
      %s337 = int_to_ptr.hbm [resolvable:$true] %s336
      %342 = dma.vmem_to_hbm [thread:$0]  %s335, 256, %s337, [#allocation4], 128, 128, 8
    $region49: #{tpu_custom_call.1} parent=1 // pred_fallthru
      _
    // Predicated region
    $region50: #{tpu_custom_call.1} parent=1 // pred_check
      _
    $region51: #{tpu_custom_call.1} parent=1 // pred_check_branch
      %344 = sbr.rel (0) target = $region53
    $region52: #{tpu_custom_call.1} parent=1 // pred_region
      %346 = dma.done [#allocation4], 256
    $region53: #{tpu_custom_call.1} parent=1 // pred_fallthru
      _
    %347 = vsyncpa [#allocation3], 1
    %348 = vsyncpa [#allocation6], 1
    %349 = vsyncpa [#allocation4], 1

</llo_original>
